<compile_context>
chip_gen: v5e
topology: v5e:2x2
jax: 0.10.0
libtpu: 0.0.40
codegen_flags: <defaults>
</compile_context>

<pallas_src>
import jax
import jax.numpy as jnp
from jax.experimental import pallas as pl
from jax.experimental.pallas import tpu as pltpu

HIDDEN_DIM = 64

_SUBLANE = 8
_FAST_PATH_MAX_ROWS = 2048   # single-tile fast path for typical DDPG batches
_TARGET_TILE_ROWS = 2048     # tiled path: ~2K-row batch tiles


def _round_up(n, m):
    return ((n + m - 1) // m) * m


def _two_layer_fc_kernel(x_ref, w1_ref, b1_ref, w2_ref, b2_ref, w3_ref, b3_ref,
                         o_ref):
    # Three back-to-back MXU matmuls, f32 operands + f32 accumulation (MXU has
    # ample slack at these shapes, so f32 costs nothing and keeps exact parity
    # with the PyTorch float32 module).  Bias add / ReLU run on the VPU.
    x = x_ref[...]

    h1 = jnp.dot(x, w1_ref[...], preferred_element_type=jnp.float32)
    h1 = jnp.maximum(h1 + b1_ref[...], 0.0)

    h2 = jnp.dot(h1, w2_ref[...], preferred_element_type=jnp.float32)
    h2 = jnp.maximum(h2 + b2_ref[...], 0.0)

    y = jnp.dot(h2, w3_ref[...], preferred_element_type=jnp.float32)
    o_ref[...] = (y + b3_ref[...]).astype(o_ref.dtype)      # out_fn = identity


@jax.jit
def two_layer_fc(x, w1, b1, w2, b2, w3, b3):
    B, num_in = x.shape
    hid = w1.shape[1]
    num_out = w3.shape[1]

    # Weight/bias specs are identical in both paths: full-array blocks with a
    # constant index_map (VMEM-resident across all grid steps).
    def w_specs(nargs):
        idx = (lambda i: (0, 0)) if nargs == 1 else (lambda: (0, 0))
        return [
            pl.BlockSpec((num_in, hid), idx),     # w1
            pl.BlockSpec((1, hid), idx),          # b1
            pl.BlockSpec((hid, hid), idx),        # w2
            pl.BlockSpec((1, hid), idx),          # b2
            pl.BlockSpec((hid, num_out), idx),    # w3
            pl.BlockSpec((1, num_out), idx),      # b3
        ]

    if B <= _FAST_PATH_MAX_ROWS:
        # Single-tile fast path: every block equals the full array (legal even
        # when dims are not (8,128)-aligned), output is exactly (B, num_out),
        # no padding and no final slice.
        return pl.pallas_call(
            _two_layer_fc_kernel,
            out_shape=jax.ShapeDtypeStruct((B, num_out), jnp.float32),
            grid=(1,),
            in_specs=[pl.BlockSpec((B, num_in), lambda i: (0, 0))]
            + w_specs(1),
            out_specs=pl.BlockSpec((B, num_out), lambda i: (0, 0)),
        )(x, w1, b1, w2, b2, w3, b3)

    # Tiled path for large batches: ~2K-row tiles, even number (>=2) of
    # parallel steps for v7x megacore.  Only x rows are (cheaply) padded so
    # that the batch tile divides the batch.
    num_tiles = max(2, pl.cdiv(B, _TARGET_TILE_ROWS))
    num_tiles += num_tiles % 2                      # even split across 2 TCs
    tb = _round_up(pl.cdiv(B, num_tiles), _SUBLANE)
    grid = pl.cdiv(B, tb)
    b_pad = grid * tb

    x_in = jnp.pad(x, ((0, b_pad - B), (0, 0))) if b_pad != B else x

    out = pl.pallas_call(
        _two_layer_fc_kernel,
        out_shape=jax.ShapeDtypeStruct((b_pad, num_out), jnp.float32),
        grid=(grid,),
        in_specs=[pl.BlockSpec((tb, num_in), lambda i: (i, 0))]   # x: streamed
        + w_specs(1),
        out_specs=pl.BlockSpec((tb, num_out), lambda i: (i, 0)),
        compiler_params=pltpu.CompilerParams(
            dimension_semantics=("parallel",)),
    )(x_in, w1, b1, w2, b2, w3, b3)

    return out[:B] if b_pad != B else out


def init_params(key, num_in, num_out, hidden_dim):
    """Matches torch.nn.Linear's U(-1/sqrt(fan_in), +1/sqrt(fan_in)) init.

    Weights are returned already transposed to (in, out), f32 — the exact
    layout the kernel consumes, so the forward pass does no per-call
    padding, casting or transposition."""
    ks = jax.random.split(key, 6)

    def lin(kw, kb, fan_in, fan_out):
        bound = 1.0 / jnp.sqrt(jnp.float32(fan_in))
        w = jax.random.uniform(kw, (fan_in, fan_out), jnp.float32, -bound, bound)
        b = jax.random.uniform(kb, (1, fan_out), jnp.float32, -bound, bound)
        return w, b

    w1, b1 = lin(ks[0], ks[1], num_in, hidden_dim)
    w2, b2 = lin(ks[2], ks[3], hidden_dim, hidden_dim)
    w3, b3 = lin(ks[4], ks[5], hidden_dim, num_out)
    return w1, b1, w2, b2, w3, b3


def reference_f32(x, w1, b1, w2, b2, w3, b3):
    hp = jax.lax.Precision.HIGHEST
    h1 = jax.nn.relu(jnp.dot(x, w1, precision=hp) + b1)
    h2 = jax.nn.relu(jnp.dot(h1, w2, precision=hp) + b2)
    return jnp.dot(h2, w3, precision=hp) + b3


if __name__ == "__main__":
    key = jax.random.PRNGKey(0)
    k_x, k_x2, k_p = jax.random.split(key, 3)

    batch, num_in, num_out = 2, 8, 4          # small DDPG-style actor/critic MLP
    params = init_params(k_p, num_in, num_out, HIDDEN_DIM)

    # Small-batch check -> single-tile fast path (no padding, no slice).
    x = jax.random.normal(k_x, (batch, num_in), jnp.float32)
    out = jax.block_until_ready(two_layer_fc(x, *params))
    assert out.shape == (batch, num_out)
    assert jnp.allclose(out, reference_f32(x, *params), atol=1e-2, rtol=1e-2), \
        "mismatch vs f32 reference (fast path)"

    # Large-batch check -> tiled path (streamed x, megacore split, row padding).
    x2 = jax.random.normal(k_x2, (4500, num_in), jnp.float32)
    out2 = jax.block_until_ready(two_layer_fc(x2, *params))
    assert out2.shape == (4500, num_out)
    assert jnp.allclose(out2, reference_f32(x2, *params), atol=1e-2, rtol=1e-2), \
        "mismatch vs f32 reference (tiled path)"

    print("KERNEL_OK")
</pallas_src>

<mosaic_0001>
module attributes {stable_mosaic.version = 11 : i64} {
  func.func @_two_layer_fc_kernel(%arg0: i32, %arg1: memref<2x8xf32, #tpu.memory_space<vmem>>, %arg2: memref<8x64xf32, #tpu.memory_space<vmem>>, %arg3: memref<1x64xf32, #tpu.memory_space<vmem>>, %arg4: memref<64x64xf32, #tpu.memory_space<vmem>>, %arg5: memref<1x64xf32, #tpu.memory_space<vmem>>, %arg6: memref<64x4xf32, #tpu.memory_space<vmem>>, %arg7: memref<1x4xf32, #tpu.memory_space<vmem>>, %arg8: memref<2x4xf32, #tpu.memory_space<vmem>>) attributes {dimension_semantics = [#tpu.dimension_semantics<arbitrary>], iteration_bounds = array<i64: 1>, scalar_prefetch = 0 : i64, scratch_operands = 0 : i64, tpu.core_type = #tpu.core_type<tc>, window_params = [{pipeline_mode = #tpu.pipeline_mode<synchronous>, transform_indices = @transform_0, window_bounds = array<i64: 2, 8>}, {pipeline_mode = #tpu.pipeline_mode<synchronous>, transform_indices = @transform_1, window_bounds = array<i64: 8, 64>}, {pipeline_mode = #tpu.pipeline_mode<synchronous>, transform_indices = @transform_2, window_bounds = array<i64: 1, 64>}, {pipeline_mode = #tpu.pipeline_mode<synchronous>, transform_indices = @transform_3, window_bounds = array<i64: 64, 64>}, {pipeline_mode = #tpu.pipeline_mode<synchronous>, transform_indices = @transform_4, window_bounds = array<i64: 1, 64>}, {pipeline_mode = #tpu.pipeline_mode<synchronous>, transform_indices = @transform_5, window_bounds = array<i64: 64, 4>}, {pipeline_mode = #tpu.pipeline_mode<synchronous>, transform_indices = @transform_6, window_bounds = array<i64: 1, 4>}, {pipeline_mode = #tpu.pipeline_mode<synchronous>, transform_indices = @transform_7, window_bounds = array<i64: 2, 4>}]} {
    %c0 = arith.constant 0 : index
    %c0_0 = arith.constant 0 : index
    %0 = vector.load %arg1[%c0, %c0_0] : memref<2x8xf32, #tpu.memory_space<vmem>>, vector<2x8xf32>
    %c0_1 = arith.constant 0 : index
    %c0_2 = arith.constant 0 : index
    %1 = vector.load %arg2[%c0_1, %c0_2] : memref<8x64xf32, #tpu.memory_space<vmem>>, vector<8x64xf32>
    %cst = arith.constant dense<0.000000e+00> : vector<2x64xf32>
    %2 = tpu.matmul %0, %1, %cst {dimension_numbers = #tpu.dot_dimension_numbers<[1], [0], [0], [1], [0, 0, 1, 1], [], []>} : vector<2x8xf32>, vector<8x64xf32>, vector<2x64xf32> -> vector<2x64xf32>
    %c0_3 = arith.constant 0 : index
    %c0_4 = arith.constant 0 : index
    %3 = vector.load %arg3[%c0_3, %c0_4] : memref<1x64xf32, #tpu.memory_space<vmem>>, vector<1x64xf32>
    %4 = vector.broadcast %3 : vector<1x64xf32> to vector<2x64xf32>
    %5 = arith.addf %2, %4 : vector<2x64xf32>
    %cst_5 = arith.constant 0.000000e+00 : f32
    %6 = vector.broadcast %cst_5 : f32 to vector<2x64xf32>
    %7 = arith.maximumf %5, %6 : vector<2x64xf32>
    %c0_6 = arith.constant 0 : index
    %c0_7 = arith.constant 0 : index
    %8 = vector.load %arg4[%c0_6, %c0_7] : memref<64x64xf32, #tpu.memory_space<vmem>>, vector<64x64xf32>
    %cst_8 = arith.constant dense<0.000000e+00> : vector<2x64xf32>
    %9 = tpu.matmul %7, %8, %cst_8 {dimension_numbers = #tpu.dot_dimension_numbers<[1], [0], [0], [1], [0, 0, 1, 1], [], []>} : vector<2x64xf32>, vector<64x64xf32>, vector<2x64xf32> -> vector<2x64xf32>
    %c0_9 = arith.constant 0 : index
    %c0_10 = arith.constant 0 : index
    %10 = vector.load %arg5[%c0_9, %c0_10] : memref<1x64xf32, #tpu.memory_space<vmem>>, vector<1x64xf32>
    %11 = vector.broadcast %10 : vector<1x64xf32> to vector<2x64xf32>
    %12 = arith.addf %9, %11 : vector<2x64xf32>
    %cst_11 = arith.constant 0.000000e+00 : f32
    %13 = vector.broadcast %cst_11 : f32 to vector<2x64xf32>
    %14 = arith.maximumf %12, %13 : vector<2x64xf32>
    %c0_12 = arith.constant 0 : index
    %c0_13 = arith.constant 0 : index
    %15 = vector.load %arg6[%c0_12, %c0_13] : memref<64x4xf32, #tpu.memory_space<vmem>>, vector<64x4xf32>
    %cst_14 = arith.constant dense<0.000000e+00> : vector<2x4xf32>
    %16 = tpu.matmul %14, %15, %cst_14 {dimension_numbers = #tpu.dot_dimension_numbers<[1], [0], [0], [1], [0, 0, 1, 1], [], []>} : vector<2x64xf32>, vector<64x4xf32>, vector<2x4xf32> -> vector<2x4xf32>
    %c0_15 = arith.constant 0 : index
    %c0_16 = arith.constant 0 : index
    %17 = vector.load %arg7[%c0_15, %c0_16] : memref<1x4xf32, #tpu.memory_space<vmem>>, vector<1x4xf32>
    %18 = vector.broadcast %17 : vector<1x4xf32> to vector<2x4xf32>
    %19 = arith.addf %16, %18 : vector<2x4xf32>
    %c0_17 = arith.constant 0 : index
    %c0_18 = arith.constant 0 : index
    %20 = vector.load %arg8[%c0_17, %c0_18] : memref<2x4xf32, #tpu.memory_space<vmem>>, vector<2x4xf32>
    tpu.vector_store %arg8[%c0_17, %c0_18], %19 {strides = array<i32>} : memref<2x4xf32, #tpu.memory_space<vmem>>, vector<2x4xf32>,
    return
  }
  func.func @transform_0(%arg0: i32) -> (i32, i32) {
    %c0_i32 = arith.constant 0 : i32
    %c0_i32_0 = arith.constant 0 : i32
    %c0_i32_1 = arith.constant 0 : i32
    return %c0_i32, %c0_i32_0 : i32, i32
  }
  func.func @transform_1(%arg0: i32) -> (i32, i32) {
    %c0_i32 = arith.constant 0 : i32
    %c0_i32_0 = arith.constant 0 : i32
    %c0_i32_1 = arith.constant 0 : i32
    return %c0_i32, %c0_i32_0 : i32, i32
  }
  func.func @transform_2(%arg0: i32) -> (i32, i32) {
    %c0_i32 = arith.constant 0 : i32
    %c0_i32_0 = arith.constant 0 : i32
    %c0_i32_1 = arith.constant 0 : i32
    return %c0_i32, %c0_i32_0 : i32, i32
  }
  func.func @transform_3(%arg0: i32) -> (i32, i32) {
    %c0_i32 = arith.constant 0 : i32
    %c0_i32_0 = arith.constant 0 : i32
    %c0_i32_1 = arith.constant 0 : i32
    return %c0_i32, %c0_i32_0 : i32, i32
  }
  func.func @transform_4(%arg0: i32) -> (i32, i32) {
    %c0_i32 = arith.constant 0 : i32
    %c0_i32_0 = arith.constant 0 : i32
    %c0_i32_1 = arith.constant 0 : i32
    return %c0_i32, %c0_i32_0 : i32, i32
  }
  func.func @transform_5(%arg0: i32) -> (i32, i32) {
    %c0_i32 = arith.constant 0 : i32
    %c0_i32_0 = arith.constant 0 : i32
    %c0_i32_1 = arith.constant 0 : i32
    return %c0_i32, %c0_i32_0 : i32, i32
  }
  func.func @transform_6(%arg0: i32) -> (i32, i32) {
    %c0_i32 = arith.constant 0 : i32
    %c0_i32_0 = arith.constant 0 : i32
    %c0_i32_1 = arith.constant 0 : i32
    return %c0_i32, %c0_i32_0 : i32, i32
  }
  func.func @transform_7(%arg0: i32) -> (i32, i32) {
    %c0_i32 = arith.constant 0 : i32
    %c0_i32_0 = arith.constant 0 : i32
    %c0_i32_1 = arith.constant 0 : i32
    return %c0_i32, %c0_i32_0 : i32, i32
  }
}

</mosaic_0001>

<llo_original>
// kernel: two_layer_fc.1
$region0: #{two_layer_fc.1}
  #allocation0 [shape = 'u32[]', space=smem, size = 0x4, offset = 0x4, fixed_abs, tag = 'smem constant byte address 0x4 - core index']
  #allocation1 [shape = 'u32[72,128]{1,0:T(1,128)}', space=vmem, size = 0x9000, scoped, tag = 'internal scratch']
  %s0 = inlined_call_operand.vmem [shape: f32[2,8], index: 0, kind: input, shape index: {}]
  %s1 = inlined_call_operand.hbm [shape: f32[8,64], index: 1, kind: input, shape index: {}]
  %s2 = inlined_call_operand.vmem [shape: f32[1,64], index: 2, kind: input, shape index: {}]
  %s3 = inlined_call_operand.vmem [shape: f32[64,64], index: 3, kind: input, shape index: {}]
  %s4 = inlined_call_operand.vmem [shape: f32[1,64], index: 4, kind: input, shape index: {}]
  %s5 = inlined_call_operand.vmem [shape: f32[64,4], index: 5, kind: input, shape index: {}]
  %s6 = inlined_call_operand.vmem [shape: f32[1,4], index: 6, kind: input, shape index: {}]
  %s7 = inlined_call_operand.hbm [shape: f32[2,4], index: 7, kind: output, shape index: {}]
  %s8 = sld [smem:[#allocation0]]
  $region42: #{two_layer_fc.1} parent=0
    _
  %s10 = ssub.s32 1, %s8
  %s11 = scalar_select 0, %s10, %s8
  $region1: #{two_layer_fc.1} parent=0
    #allocation2 [shape = 'u8[4096]{0}', space=vmem, size = 0x1000, scoped, tag = 'input window, operand 1, single buffered']
    #allocation3 [shape = 's32[1]{0}', space=sflag, size = 0x4, scoped, tag = 'scoped memory for two_layer_fc.1']
    #allocation4 [shape = 's32[1]{0}', space=sflag, size = 0x4, scoped, tag = 'scoped memory for two_layer_fc.1']
    #allocation5 [shape = 'u8[1024]{0}', space=vmem, size = 0x400, scoped, tag = 'output window, operand 0, single buffered']
    %12 = vsyncpa [#allocation3], 0
    %13 = vsyncpa [#allocation4], 0
    // Predicated region
    $region2: #{two_layer_fc.1} parent=1 // pred_check
      _
    $region3: #{two_layer_fc.1} parent=1 // pred_check_branch
      %15 = sbr.rel (0) target = $region5
    $region4: #{two_layer_fc.1} parent=1 // pred_region
      _
    $region5: #{two_layer_fc.1} parent=1 // pred_fallthru
      _
    // Predicated region
    $region6: #{two_layer_fc.1} parent=1 // pred_check
      _
    $region7: #{two_layer_fc.1} parent=1 // pred_check_branch
      %17 = sbr.rel (0) target = $region9
    $region8: #{two_layer_fc.1} parent=1 // pred_region
      %19 = vsyncadd [#allocation3], 0
      %s21 = sshll.u32 %s1, 4
      %s22 = int_to_ptr.hbm [resolvable:$true] %s21
      %s23 = sshll.u32 [#allocation2], 4
      %s24 = int_to_ptr.vmem [resolvable:$true] %s23
      %26 = dma.hbm_to_vmem [thread:$0]  %s22, 128, %s24, [#allocation3]
    $region9: #{two_layer_fc.1} parent=1 // pred_fallthru
      _
    // Predicated region
    $region10: #{two_layer_fc.1} parent=1 // pred_check
      _
    $region11: #{two_layer_fc.1} parent=1 // pred_check_branch
      %28 = sbr.rel (0) target = $region13
    $region12: #{two_layer_fc.1} parent=1 // pred_region
      _
    $region13: #{two_layer_fc.1} parent=1 // pred_fallthru
      _
    // Predicated region
    $region14: #{two_layer_fc.1} parent=1 // pred_check
      _
    $region15: #{two_layer_fc.1} parent=1 // pred_check_branch
      %30 = sbr.rel (0) target = $region17
    $region16: #{two_layer_fc.1} parent=1 // pred_region
      _
    $region17: #{two_layer_fc.1} parent=1 // pred_fallthru
      _
    // Predicated region
    $region18: #{two_layer_fc.1} parent=1 // pred_check
      _
    $region19: #{two_layer_fc.1} parent=1 // pred_check_branch
      %32 = sbr.rel (0) target = $region21
    $region20: #{two_layer_fc.1} parent=1 // pred_region
      _
    $region21: #{two_layer_fc.1} parent=1 // pred_fallthru
      _
    // Predicated region
    $region22: #{two_layer_fc.1} parent=1 // pred_check
      _
    $region23: #{two_layer_fc.1} parent=1 // pred_check_branch
      %34 = sbr.rel (0) target = $region25
    $region24: #{two_layer_fc.1} parent=1 // pred_region
      _
    $region25: #{two_layer_fc.1} parent=1 // pred_fallthru
      _
    // Predicated region
    $region26: #{two_layer_fc.1} parent=1 // pred_check
      _
    $region27: #{two_layer_fc.1} parent=1 // pred_check_branch
      %36 = sbr.rel (0) target = $region29
    $region28: #{two_layer_fc.1} parent=1 // pred_region
      _
    $region29: #{two_layer_fc.1} parent=1 // pred_fallthru
      _
    // Predicated region
    $region30: #{two_layer_fc.1} parent=1 // pred_check
      _
    $region31: #{two_layer_fc.1} parent=1 // pred_check_branch
      %38 = sbr.rel (0) target = $region33
    $region32: #{two_layer_fc.1} parent=1 // pred_region
      %40 = dma.done [#allocation3], 128
    $region33: #{two_layer_fc.1} parent=1 // pred_fallthru
      _
    %v41 = vld [vmem:[%s0] sm:$0x3]
    %v42 = vld [vmem:[#allocation2] sm:$0xff]
    %v43 = vld [vmem:[%s2] sm:$0x1]
    %v45 = vperm.slane %v43, 0
    %vm47 = vcmask 64512
    %v49 = vsel %vm47, %v41, 0
    %51 = vmatpush.msra.mxu0 0.0
    %52 = vmatpush.msra.mxu0 0.0
    %53 = vmatpush.msra.mxu0 0.0
    %54 = vmatpush.msra.mxu0 0.0
    %55 = vmatpush.msra.mxu0 0.0
    %56 = vmatpush.msra.mxu0 0.0
    %57 = vmatpush.msra.mxu0 0.0
    %58 = vmatpush.msra.mxu0 0.0
    %59 = vmatpush.msra.mxu0 0.0
    %60 = vmatpush.msra.mxu0 0.0
    %61 = vmatpush.msra.mxu0 0.0
    %62 = vmatpush.msra.mxu0 0.0
    %63 = vmatpush.msra.mxu0 0.0
    %64 = vmatpush.msra.mxu0 0.0
    %65 = vmatpush.msra.mxu0 0.0
    %66 = vmatpush.msra.mxu0 %v42
    %67 = vmatmul.f32.gmra.mxu0 %v49
    %v68 = vpop.f32.mrf.mxu0
    %v69 = vadd.f32 %v45, %v68
    %70 = vdwg.mxu0
    %v71 = vmax.f32 %v69, 0.0
    %v72 = vld [vmem:[%s3] sm:$0xff]
    %v73 = vld [vmem:[%s3 + $0x8] sm:$0xff]
    %v74 = vld [vmem:[%s3 + $0x10] sm:$0xff]
    %v75 = vld [vmem:[%s3 + $0x18] sm:$0xff]
    %v76 = vld [vmem:[%s3 + $0x20] sm:$0xff]
    %v77 = vld [vmem:[%s3 + $0x28] sm:$0xff]
    %v78 = vld [vmem:[%s3 + $0x30] sm:$0xff]
    %v79 = vld [vmem:[%s3 + $0x38] sm:$0xff]
    %v80 = vld [vmem:[%s4] sm:$0x1]
    %v82 = vperm.slane %v80, 0
    %vm84 = vcmask 523264
    %v86 = vsel %vm84, %v71, 0
    %88 = vmatpush.msra.mxu0 0.0
    %89 = vmatpush.msra.mxu0 0.0
    %90 = vmatpush.msra.mxu0 0.0
    %91 = vmatpush.msra.mxu0 0.0
    %92 = vmatpush.msra.mxu0 0.0
    %93 = vmatpush.msra.mxu0 0.0
    %94 = vmatpush.msra.mxu0 0.0
    %95 = vmatpush.msra.mxu0 0.0
    %96 = vmatpush.msra.mxu0 %v79
    %97 = vmatpush.msra.mxu0 %v78
    %98 = vmatpush.msra.mxu0 %v77
    %99 = vmatpush.msra.mxu0 %v76
    %100 = vmatpush.msra.mxu0 %v75
    %101 = vmatpush.msra.mxu0 %v74
    %102 = vmatpush.msra.mxu0 %v73
    %103 = vmatpush.msra.mxu0 %v72
    %104 = vmatmul.f32.gmra.mxu0 %v86
    %v105 = vpop.f32.mrf.mxu0
    %v106 = vadd.f32 %v82, %v105
    %107 = vdwg.mxu0
    %v108 = vmax.f32 %v106, 0.0
    %v109 = vld [vmem:[%s5] sm:$0xff]
    %v110 = vld [vmem:[%s5 + $0x8] sm:$0xff]
    %v111 = vld [vmem:[%s5 + $0x10] sm:$0xff]
    %v112 = vld [vmem:[%s5 + $0x18] sm:$0xff]
    %v113 = vld [vmem:[%s5 + $0x20] sm:$0xff]
    %v114 = vld [vmem:[%s5 + $0x28] sm:$0xff]
    %v115 = vld [vmem:[%s5 + $0x30] sm:$0xff]
    %v116 = vld [vmem:[%s5 + $0x38] sm:$0xff]
    %v117 = vld [vmem:[%s6] sm:$0x1]
    %v119 = vperm.slane %v117, 0
    %v122 = vsel %vm84, %v108, 0
    %124 = vmatpush.msra.mxu0 0.0
    %125 = vmatpush.msra.mxu0 0.0
    %126 = vmatpush.msra.mxu0 0.0
    %127 = vmatpush.msra.mxu0 0.0
    %128 = vmatpush.msra.mxu0 0.0
    %129 = vmatpush.msra.mxu0 0.0
    %130 = vmatpush.msra.mxu0 0.0
    %131 = vmatpush.msra.mxu0 0.0
    %132 = vmatpush.msra.mxu0 %v116
    %133 = vmatpush.msra.mxu0 %v115
    %134 = vmatpush.msra.mxu0 %v114
    %135 = vmatpush.msra.mxu0 %v113
    %136 = vmatpush.msra.mxu0 %v112
    %137 = vmatpush.msra.mxu0 %v111
    %138 = vmatpush.msra.mxu0 %v110
    %139 = vmatpush.msra.mxu0 %v109
    %140 = vmatmul.f32.gmra.mxu0 %v122
    %v141 = vpop.f32.mrf.mxu0
    %v142 = vadd.f32 %v119, %v141
    %143 = vdwg.mxu0
    %vm144 = vcmask 25600
    %145 = vst.msk [vmem:[#allocation5] sm:$0x3] %vm144, %v142
    // Predicated region
    $region34: #{two_layer_fc.1} parent=1 // pred_check
      _
    $region35: #{two_layer_fc.1} parent=1 // pred_check_branch
      %147 = sbr.rel (0) target = $region37
    $region36: #{two_layer_fc.1} parent=1 // pred_region
      %149 = vsyncadd [#allocation4], 0
      %s151 = sshll.u32 [#allocation5], 4
      %s152 = int_to_ptr.vmem [resolvable:$true] %s151
      %s153 = sshll.u32 %s7, 4
      %s154 = int_to_ptr.hbm [resolvable:$true] %s153
      %156 = dma.vmem_to_hbm [thread:$0]  %s152, 32, %s154, [#allocation4]
    $region37: #{two_layer_fc.1} parent=1 // pred_fallthru
      _
    // Predicated region
    $region38: #{two_layer_fc.1} parent=1 // pred_check
      _
    $region39: #{two_layer_fc.1} parent=1 // pred_check_branch
      %158 = sbr.rel (0) target = $region41
    $region40: #{two_layer_fc.1} parent=1 // pred_region
      %160 = dma.done [#allocation4], 32
    $region41: #{two_layer_fc.1} parent=1 // pred_fallthru
      _
    %161 = vsyncpa [#allocation3], 1
    %162 = vsyncpa [#allocation4], 1

</llo_original>
